<compile_context>
chip_gen: v7x
topology: tpu7x:2x2x1
jax: 0.10.0
libtpu: 0.0.40
codegen_flags: <defaults>
</compile_context>

<pallas_src>
import functools
import math

import jax
import jax.numpy as jnp
from jax.experimental import pallas as pl
from jax.experimental.pallas import tpu as pltpu


def _round_up(n, m):
    return ((n + m - 1) // m) * m


def _pad_axis(x, axis, target):
    pad = target - x.shape[axis]
    if pad <= 0:
        return x
    widths = [(0, 0)] * x.ndim
    widths[axis] = (0, pad)
    return jnp.pad(x, widths)


def _pick_bt(batch, seq, max_rows=512):
    """Largest divisor of `batch` keeping Bt*S fused rows within a good tile."""
    bt = 1
    for cand in range(1, batch + 1):
        if batch % cand == 0 and cand * seq <= max_rows:
            bt = cand
    return bt


def _transformer_kernel(x_ref, qkv_ref, w1_ref, b1_ref, w2_ref, b2_ref,
                        o_ref, *, d_valid):
    Bt, S, Dp = x_ref.shape
    x = x_ref[...]                                   # (Bt, S, Dp) bf16
    x2 = x.reshape(Bt * S, Dp)                       # fuse batch into MXU M dim

    # --- fused Q/K/V projection (F, 1/sqrt(D) already folded into weights) ---
    qkv = jnp.dot(x2, qkv_ref[...], preferred_element_type=jnp.float32)  # (M, 3*Dp)
    q3 = qkv[:, 0 * Dp:1 * Dp].reshape(Bt, S, Dp).astype(jnp.bfloat16)
    k3 = qkv[:, 1 * Dp:2 * Dp].reshape(Bt, S, Dp).astype(jnp.bfloat16)
    v3 = qkv[:, 2 * Dp:3 * Dp].reshape(Bt, S, Dp).astype(jnp.bfloat16)

    # --- causal-masked softmax attention (per batch element) ---
    scores = jnp.einsum('bqd,bkd->bqk', q3, k3,
                        preferred_element_type=jnp.float32)   # (Bt, S, S)
    row = jax.lax.broadcasted_iota(jnp.int32, (Bt, S, S), 1)
    col = jax.lax.broadcasted_iota(jnp.int32, (Bt, S, S), 2)
    scores = jnp.where(col > row, -1e30, scores)              # triu, diag=1

    m = jnp.max(scores, axis=-1, keepdims=True)
    p = jnp.exp(scores - m)
    inv_l = pl.reciprocal(jnp.sum(p, axis=-1, keepdims=True), approx=True)
    probs = (p * inv_l).astype(jnp.bfloat16)

    a = jnp.einsum('bqk,bkd->bqd', probs, v3,
                   preferred_element_type=jnp.float32)        # (Bt, S, Dp)

    # --- LayerNorm statistics over the *valid* D features (padded lanes are 0);
    #     gamma/beta are folded into fc1, so only normalization happens here ---
    inv_d = 1.0 / d_valid
    mean = jnp.sum(a, axis=-1, keepdims=True) * inv_d
    var = jnp.sum(a * a, axis=-1, keepdims=True) * inv_d - mean * mean
    xn = (a - mean) * jax.lax.rsqrt(var + 1e-5)

    # --- MLP: fc1(+folded LN affine) -> ReLU -> fc2 (batch fused into M) ---
    xn2 = xn.reshape(Bt * S, Dp).astype(jnp.bfloat16)
    h = jnp.dot(xn2, w1_ref[...], preferred_element_type=jnp.float32) + b1_ref[...]
    h = jnp.maximum(h, 0.0).astype(jnp.bfloat16)
    out = jnp.dot(h, w2_ref[...], preferred_element_type=jnp.float32) + b2_ref[...]

    o_ref[...] = out.reshape(Bt, S, -1).astype(o_ref.dtype)


def transformer_seq2seq_pallas(tokens, params, attention_input="both"):
    """Forward pass of TransformerSeq2Seq.

    tokens: int32 [B, S]
    params: dict with keys
      sem_emb [V, D], pos_emb [S, D],
      Q, K, V  [D, D], ln_w [D], ln_b [D],
      fc1_w [D, H], fc1_b [H], fc2_w [H, C], fc2_b [C]
    """
    B, S = tokens.shape
    D = params["sem_emb"].shape[1]
    H = params["fc1_w"].shape[1]
    C = params["fc2_w"].shape[1]

    Dp = _round_up(D, 128)
    Hp = _round_up(H, 128)
    Cp = _round_up(C, 128)

    # ---- plain-JAX glue: embedding lookups + half-zeroing + F folding ----
    x_sem = params["sem_emb"][tokens]                                   # [B, S, D]
    x_pos = jnp.broadcast_to(params["pos_emb"][None, :, :], (B, S, D))  # [B, S, D]

    half = D // 2
    feat = jnp.arange(D)
    if attention_input in ("only_sem", "only_pos"):
        x_sem = jnp.where(feat[None, None, :] >= half, 0.0, x_sem)
        x_pos = jnp.where(feat[None, None, :] < half, 0.0, x_pos)
    x = (x_sem + x_pos).astype(jnp.float32)

    # F matrix (diagonal selector) folded into Q and K; 1/sqrt(D) folded into Q.
    if attention_input == "both":
        f_diag = jnp.ones((D,), jnp.float32)
    elif attention_input == "only_sem":
        f_diag = (feat < half).astype(jnp.float32)
    elif attention_input == "only_pos":
        f_diag = (feat >= half).astype(jnp.float32)
    else:
        raise ValueError(attention_input)
    q_eff = (f_diag[:, None] * params["Q"]) * (1.0 / math.sqrt(D))
    k_eff = f_diag[:, None] * params["K"]

    # LayerNorm affine folded into fc1: (xn*g + b) @ W1 + b1 = xn @ (g*W1) + (b@W1 + b1)
    w1_eff = params["ln_w"][:, None] * params["fc1_w"]                  # [D, H]
    b1_eff = params["fc1_b"] + params["ln_b"] @ params["fc1_w"]         # [H]

    # ---- zero-pad everything to lane-dense (multiples of 128) shapes ----
    def pad2(w, r, c):
        return _pad_axis(_pad_axis(w, 0, r), 1, c)

    x_p = _pad_axis(x, 2, Dp).astype(jnp.bfloat16)                      # (B, S, Dp)
    qkv_w = jnp.concatenate(
        [pad2(q_eff, Dp, Dp), pad2(k_eff, Dp, Dp), pad2(params["V"], Dp, Dp)],
        axis=1).astype(jnp.bfloat16)                                    # (Dp, 3*Dp)
    w1 = pad2(w1_eff, Dp, Hp).astype(jnp.bfloat16)
    w2 = pad2(params["fc2_w"], Hp, Cp).astype(jnp.bfloat16)
    b1 = _pad_axis(b1_eff, 0, Hp).reshape(1, Hp).astype(jnp.float32)
    b2 = _pad_axis(params["fc2_b"], 0, Cp).reshape(1, Cp).astype(jnp.float32)

    bt = _pick_bt(B, S)
    grid = (B // bt,)

    full = lambda shape: pl.BlockSpec(shape, lambda b: (0,) * len(shape))

    kernel = functools.partial(_transformer_kernel, d_valid=float(D))

    out = pl.pallas_call(
        kernel,
        out_shape=jax.ShapeDtypeStruct((B, S, Cp), jnp.float32),
        grid_spec=pltpu.PrefetchScalarGridSpec(
            num_scalar_prefetch=0,
            grid=grid,
            in_specs=[
                pl.BlockSpec((bt, S, Dp), lambda b: (b, 0, 0)),  # x
                full((Dp, 3 * Dp)),                              # fused QKV weights
                full((Dp, Hp)),                                  # fc1_w (LN gamma folded)
                full((1, Hp)),                                   # fc1_b (LN beta folded)
                full((Hp, Cp)),                                  # fc2_w
                full((1, Cp)),                                   # fc2_b
            ],
            out_specs=pl.BlockSpec((bt, S, Cp), lambda b: (b, 0, 0)),
        ),
        compiler_params=pltpu.CompilerParams(
            dimension_semantics=("parallel",)),
    )(x_p, qkv_w, w1, b1, w2, b2)

    return out[:, :, :C]


def init_params(key, vocab_size, model_dim, hidden_dim_fc, n_classes, seq_len):
    ks = jax.random.split(key, 10)
    s = 0.02
    return {
        "sem_emb": jax.random.normal(ks[0], (vocab_size, model_dim), jnp.float32),
        "pos_emb": jax.random.normal(ks[1], (seq_len, model_dim), jnp.float32),
        "Q": jax.random.normal(ks[2], (model_dim, model_dim), jnp.float32) * s,
        "K": jax.random.normal(ks[3], (model_dim, model_dim), jnp.float32) * s,
        "V": jax.random.normal(ks[4], (model_dim, model_dim), jnp.float32) * s,
        "ln_w": jnp.ones((model_dim,), jnp.float32),
        "ln_b": jnp.zeros((model_dim,), jnp.float32),
        "fc1_w": jax.random.normal(ks[5], (model_dim, hidden_dim_fc), jnp.float32) * s,
        "fc1_b": jax.random.normal(ks[6], (hidden_dim_fc,), jnp.float32) * s,
        "fc2_w": jax.random.normal(ks[7], (hidden_dim_fc, n_classes), jnp.float32) * s,
        "fc2_b": jax.random.normal(ks[8], (n_classes,), jnp.float32) * s,
    }


if __name__ == "__main__":
    B, S = 2, 8
    vocab_size, model_dim, hidden_dim_fc, n_classes = 50, 32, 64, 16

    key = jax.random.PRNGKey(0)
    pkey, tkey = jax.random.split(key)
    params = init_params(pkey, vocab_size, model_dim, hidden_dim_fc, n_classes, S)
    tokens = jax.random.randint(tkey, (B, S), 0, vocab_size, dtype=jnp.int32)

    out = transformer_seq2seq_pallas(tokens, params, attention_input="both")
    out = jax.block_until_ready(out)
    assert out.shape == (B, S, n_classes)
    assert bool(jnp.all(jnp.isfinite(out)))
    print("KERNEL_OK")
</pallas_src>

<mosaic_0001>
module attributes {stable_mosaic.version = 11 : i64} {
  func.func @_transformer_kernel(%arg0: i32, %arg1: memref<2x8x128xbf16, #tpu.memory_space<vmem>>, %arg2: memref<128x384xbf16, #tpu.memory_space<vmem>>, %arg3: memref<128x128xbf16, #tpu.memory_space<vmem>>, %arg4: memref<1x128xf32, #tpu.memory_space<vmem>>, %arg5: memref<128x128xbf16, #tpu.memory_space<vmem>>, %arg6: memref<1x128xf32, #tpu.memory_space<vmem>>, %arg7: memref<2x8x128xf32, #tpu.memory_space<vmem>>) attributes {dimension_semantics = [#tpu.dimension_semantics<parallel>], iteration_bounds = array<i64: 1>, scalar_prefetch = 0 : i64, scratch_operands = 0 : i64, tpu.core_type = #tpu.core_type<tc>, window_params = [{transform_indices = @transform_0, window_bounds = array<i64: 2, 8, 128>}, {pipeline_mode = #tpu.pipeline_mode<synchronous>, transform_indices = @transform_1, window_bounds = array<i64: 128, 384>}, {pipeline_mode = #tpu.pipeline_mode<synchronous>, transform_indices = @transform_2, window_bounds = array<i64: 128, 128>}, {pipeline_mode = #tpu.pipeline_mode<synchronous>, transform_indices = @transform_3, window_bounds = array<i64: 1, 128>}, {pipeline_mode = #tpu.pipeline_mode<synchronous>, transform_indices = @transform_4, window_bounds = array<i64: 128, 128>}, {pipeline_mode = #tpu.pipeline_mode<synchronous>, transform_indices = @transform_5, window_bounds = array<i64: 1, 128>}, {transform_indices = @transform_6, window_bounds = array<i64: 2, 8, 128>}]} {
    %c0 = arith.constant 0 : index
    %c0_0 = arith.constant 0 : index
    %c0_1 = arith.constant 0 : index
    %0 = vector.load %arg1[%c0, %c0_0, %c0_1] : memref<2x8x128xbf16, #tpu.memory_space<vmem>>, vector<2x8x128xbf16>
    %1 = vector.shape_cast %0 : vector<2x8x128xbf16> to vector<16x128xbf16>
    %c0_2 = arith.constant 0 : index
    %c0_3 = arith.constant 0 : index
    %2 = vector.load %arg2[%c0_2, %c0_3] : memref<128x384xbf16, #tpu.memory_space<vmem>>, vector<128x384xbf16>
    %cst = arith.constant dense<0.000000e+00> : vector<16x384xf32>
    %3 = tpu.matmul %1, %2, %cst {dimension_numbers = #tpu.dot_dimension_numbers<[1], [0], [0], [1], [0, 0, 1, 1], [], []>} : vector<16x128xbf16>, vector<128x384xbf16>, vector<16x384xf32> -> vector<16x384xf32>
    %4 = vector.extract_strided_slice %3 {offsets = [0, 0], sizes = [16, 128], strides = [1, 1]} : vector<16x384xf32> to vector<16x128xf32>
    %5 = vector.shape_cast %4 : vector<16x128xf32> to vector<2x8x128xf32>
    %6 = arith.truncf %5 : vector<2x8x128xf32> to vector<2x8x128xbf16>
    %7 = vector.extract_strided_slice %3 {offsets = [0, 128], sizes = [16, 128], strides = [1, 1]} : vector<16x384xf32> to vector<16x128xf32>
    %8 = vector.shape_cast %7 : vector<16x128xf32> to vector<2x8x128xf32>
    %9 = arith.truncf %8 : vector<2x8x128xf32> to vector<2x8x128xbf16>
    %10 = vector.extract_strided_slice %3 {offsets = [0, 256], sizes = [16, 128], strides = [1, 1]} : vector<16x384xf32> to vector<16x128xf32>
    %11 = vector.shape_cast %10 : vector<16x128xf32> to vector<2x8x128xf32>
    %12 = arith.truncf %11 : vector<2x8x128xf32> to vector<2x8x128xbf16>
    "tpu.trace_start"() <{level = 10 : i32, message = "bqd,bkd->bqk"}> : () -> ()
    %cst_4 = arith.constant dense<0.000000e+00> : vector<2x8x8xf32>
    %13 = tpu.matmul %6, %9, %cst_4 {dimension_numbers = #tpu.dot_dimension_numbers<[2], [2], [1], [1], [0, 0, 0, 1, 1, 1], [0], [0]>} : vector<2x8x128xbf16>, vector<2x8x128xbf16>, vector<2x8x8xf32> -> vector<2x8x8xf32>
    "tpu.trace_stop"() : () -> ()
    %14 = tpu.iota {dimensions = array<i32: 1>} : vector<2x8x8xi32>
    %15 = tpu.iota {dimensions = array<i32: 2>} : vector<2x8x8xi32>
    %16 = arith.cmpi sgt, %15, %14 : vector<2x8x8xi32>
    %cst_5 = arith.constant -1.000000e+30 : f32
    %17 = vector.broadcast %cst_5 : f32 to vector<2x8x8xf32>
    %18 = arith.select %16, %17, %13 : vector<2x8x8xi1>, vector<2x8x8xf32>
    %cst_6 = arith.constant dense<0xFF800000> : vector<2x8xf32>
    %19 = vector.multi_reduction <maximumf>, %18, %cst_6 [2] : vector<2x8x8xf32> to vector<2x8xf32>
    %20 = vector.shape_cast %19 : vector<2x8xf32> to vector<2x8x1xf32>
    %21 = vector.broadcast %20 : vector<2x8x1xf32> to vector<2x8x8xf32>
    %22 = arith.subf %18, %21 : vector<2x8x8xf32>
    %23 = math.exp %22 : vector<2x8x8xf32>
    %cst_7 = arith.constant dense<0.000000e+00> : vector<2x8xf32>
    %24 = vector.multi_reduction <add>, %23, %cst_7 [2] : vector<2x8x8xf32> to vector<2x8xf32>
    %25 = vector.shape_cast %24 : vector<2x8xf32> to vector<2x8x1xf32>
    %26 = tpu.reciprocal %25 {approx = true} : vector<2x8x1xf32> -> vector<2x8x1xf32>
    %27 = vector.broadcast %26 : vector<2x8x1xf32> to vector<2x8x8xf32>
    %28 = arith.mulf %23, %27 : vector<2x8x8xf32>
    %29 = arith.truncf %28 : vector<2x8x8xf32> to vector<2x8x8xbf16>
    "tpu.trace_start"() <{level = 10 : i32, message = "bqk,bkd->bqd"}> : () -> ()
    %cst_8 = arith.constant dense<0.000000e+00> : vector<2x8x128xf32>
    %30 = tpu.matmul %29, %12, %cst_8 {dimension_numbers = #tpu.dot_dimension_numbers<[2], [1], [1], [2], [0, 0, 0, 1, 1, 2], [0], [0]>} : vector<2x8x8xbf16>, vector<2x8x128xbf16>, vector<2x8x128xf32> -> vector<2x8x128xf32>
    "tpu.trace_stop"() : () -> ()
    %cst_9 = arith.constant dense<0.000000e+00> : vector<2x8xf32>
    %31 = vector.multi_reduction <add>, %30, %cst_9 [2] : vector<2x8x128xf32> to vector<2x8xf32>
    %32 = vector.shape_cast %31 : vector<2x8xf32> to vector<2x8x1xf32>
    %cst_10 = arith.constant 3.125000e-02 : f32
    %33 = vector.broadcast %cst_10 : f32 to vector<2x8x1xf32>
    %34 = arith.mulf %32, %33 : vector<2x8x1xf32>
    %35 = arith.mulf %30, %30 : vector<2x8x128xf32>
    %cst_11 = arith.constant dense<0.000000e+00> : vector<2x8xf32>
    %36 = vector.multi_reduction <add>, %35, %cst_11 [2] : vector<2x8x128xf32> to vector<2x8xf32>
    %37 = vector.shape_cast %36 : vector<2x8xf32> to vector<2x8x1xf32>
    %cst_12 = arith.constant 3.125000e-02 : f32
    %38 = vector.broadcast %cst_12 : f32 to vector<2x8x1xf32>
    %39 = arith.mulf %37, %38 : vector<2x8x1xf32>
    %40 = arith.mulf %34, %34 : vector<2x8x1xf32>
    %41 = arith.subf %39, %40 : vector<2x8x1xf32>
    %42 = vector.broadcast %34 : vector<2x8x1xf32> to vector<2x8x128xf32>
    %43 = arith.subf %30, %42 : vector<2x8x128xf32>
    %cst_13 = arith.constant 9.99999974E-6 : f32
    %44 = vector.broadcast %cst_13 : f32 to vector<2x8x1xf32>
    %45 = arith.addf %41, %44 : vector<2x8x1xf32>
    %46 = math.rsqrt %45 : vector<2x8x1xf32>
    %47 = vector.broadcast %46 : vector<2x8x1xf32> to vector<2x8x128xf32>
    %48 = arith.mulf %43, %47 : vector<2x8x128xf32>
    %49 = vector.shape_cast %48 : vector<2x8x128xf32> to vector<16x128xf32>
    %50 = arith.truncf %49 : vector<16x128xf32> to vector<16x128xbf16>
    %c0_14 = arith.constant 0 : index
    %c0_15 = arith.constant 0 : index
    %51 = vector.load %arg3[%c0_14, %c0_15] : memref<128x128xbf16, #tpu.memory_space<vmem>>, vector<128x128xbf16>
    %cst_16 = arith.constant dense<0.000000e+00> : vector<16x128xf32>
    %52 = tpu.matmul %50, %51, %cst_16 {dimension_numbers = #tpu.dot_dimension_numbers<[1], [0], [0], [1], [0, 0, 1, 1], [], []>} : vector<16x128xbf16>, vector<128x128xbf16>, vector<16x128xf32> -> vector<16x128xf32>
    %c0_17 = arith.constant 0 : index
    %c0_18 = arith.constant 0 : index
    %53 = vector.load %arg4[%c0_17, %c0_18] : memref<1x128xf32, #tpu.memory_space<vmem>>, vector<1x128xf32>
    %54 = vector.broadcast %53 : vector<1x128xf32> to vector<16x128xf32>
    %55 = arith.addf %52, %54 : vector<16x128xf32>
    %cst_19 = arith.constant 0.000000e+00 : f32
    %56 = vector.broadcast %cst_19 : f32 to vector<16x128xf32>
    %57 = arith.maximumf %55, %56 : vector<16x128xf32>
    %58 = arith.truncf %57 : vector<16x128xf32> to vector<16x128xbf16>
    %c0_20 = arith.constant 0 : index
    %c0_21 = arith.constant 0 : index
    %59 = vector.load %arg5[%c0_20, %c0_21] : memref<128x128xbf16, #tpu.memory_space<vmem>>, vector<128x128xbf16>
    %cst_22 = arith.constant dense<0.000000e+00> : vector<16x128xf32>
    %60 = tpu.matmul %58, %59, %cst_22 {dimension_numbers = #tpu.dot_dimension_numbers<[1], [0], [0], [1], [0, 0, 1, 1], [], []>} : vector<16x128xbf16>, vector<128x128xbf16>, vector<16x128xf32> -> vector<16x128xf32>
    %c0_23 = arith.constant 0 : index
    %c0_24 = arith.constant 0 : index
    %61 = vector.load %arg6[%c0_23, %c0_24] : memref<1x128xf32, #tpu.memory_space<vmem>>, vector<1x128xf32>
    %62 = vector.broadcast %61 : vector<1x128xf32> to vector<16x128xf32>
    %63 = arith.addf %60, %62 : vector<16x128xf32>
    %64 = vector.shape_cast %63 : vector<16x128xf32> to vector<2x8x128xf32>
    %c0_25 = arith.constant 0 : index
    %c0_26 = arith.constant 0 : index
    %c0_27 = arith.constant 0 : index
    %65 = vector.load %arg7[%c0_25, %c0_26, %c0_27] : memref<2x8x128xf32, #tpu.memory_space<vmem>>, vector<2x8x128xf32>
    tpu.vector_store %arg7[%c0_25, %c0_26, %c0_27], %64 {strides = array<i32>} : memref<2x8x128xf32, #tpu.memory_space<vmem>>, vector<2x8x128xf32>,
    return
  }
  func.func @transform_0(%arg0: i32) -> (i32, i32, i32) {
    %c0_i32 = arith.constant 0 : i32
    %c0_i32_0 = arith.constant 0 : i32
    %c0_i32_1 = arith.constant 0 : i32
    return %arg0, %c0_i32, %c0_i32_0 : i32, i32, i32
  }
  func.func @transform_1(%arg0: i32) -> (i32, i32) {
    %c0_i32 = arith.constant 0 : i32
    %c0_i32_0 = arith.constant 0 : i32
    %c0_i32_1 = arith.constant 0 : i32
    return %c0_i32, %c0_i32_0 : i32, i32
  }
  func.func @transform_2(%arg0: i32) -> (i32, i32) {
    %c0_i32 = arith.constant 0 : i32
    %c0_i32_0 = arith.constant 0 : i32
    %c0_i32_1 = arith.constant 0 : i32
    return %c0_i32, %c0_i32_0 : i32, i32
  }
  func.func @transform_3(%arg0: i32) -> (i32, i32) {
    %c0_i32 = arith.constant 0 : i32
    %c0_i32_0 = arith.constant 0 : i32
    %c0_i32_1 = arith.constant 0 : i32
    return %c0_i32, %c0_i32_0 : i32, i32
  }
  func.func @transform_4(%arg0: i32) -> (i32, i32) {
    %c0_i32 = arith.constant 0 : i32
    %c0_i32_0 = arith.constant 0 : i32
    %c0_i32_1 = arith.constant 0 : i32
    return %c0_i32, %c0_i32_0 : i32, i32
  }
  func.func @transform_5(%arg0: i32) -> (i32, i32) {
    %c0_i32 = arith.constant 0 : i32
    %c0_i32_0 = arith.constant 0 : i32
    %c0_i32_1 = arith.constant 0 : i32
    return %c0_i32, %c0_i32_0 : i32, i32
  }
  func.func @transform_6(%arg0: i32) -> (i32, i32, i32) {
    %c0_i32 = arith.constant 0 : i32
    %c0_i32_0 = arith.constant 0 : i32
    %c0_i32_1 = arith.constant 0 : i32
    return %arg0, %c0_i32, %c0_i32_0 : i32, i32, i32
  }
}

</mosaic_0001>

<llo_original>
// kernel: tpu_custom_call.1
$region0: #{tpu_custom_call.1}
  #allocation0 [shape = 'u32[]', space=smem, size = 0x4, offset = 0x4, fixed_abs, tag = 'smem constant byte address 0x4 - core index']
  #allocation1 [shape = 'u32[144,128]{1,0:T(1,128)}', space=vmem, size = 0x12000, scoped, tag = 'internal scratch']
  %s0 = inlined_call_operand.hbm [shape: bf16[2,8,128], index: 0, kind: input, shape index: {}]
  %s1 = inlined_call_operand.hbm [shape: bf16[128,384], index: 1, kind: input, shape index: {}]
  %s2 = inlined_call_operand.hbm [shape: bf16[128,128], index: 2, kind: input, shape index: {}]
  %s3 = inlined_call_operand.vmem [shape: f32[1,128], index: 3, kind: input, shape index: {}]
  %s4 = inlined_call_operand.hbm [shape: bf16[128,128], index: 4, kind: input, shape index: {}]
  %s5 = inlined_call_operand.vmem [shape: f32[1,128], index: 5, kind: input, shape index: {}]
  %s6 = inlined_call_operand.hbm [shape: f32[2,8,128], index: 6, kind: output, shape index: {}]
  %s7 = sld [smem:[#allocation0]]
  $region50: #{tpu_custom_call.1} parent=0
    _
  %s9 = ssub.s32 1, %s7
  %s10 = scalar_select 0, %s9, %s7
  $region1: #{tpu_custom_call.1} parent=0
    #allocation2 [shape = 'u8[4096]{0}', space=vmem, size = 0x1000, scoped, tag = 'input window, operand 0, single buffered']
    #allocation3 [shape = 's32[1]{0}', space=sflag, size = 0x4, scoped, tag = 'scoped memory for tpu_custom_call.1']
    #allocation4 [shape = 's32[1]{0}', space=sflag, size = 0x4, scoped, tag = 'scoped memory for tpu_custom_call.1']
    #allocation5 [shape = 'u8[98304]{0}', space=vmem, size = 0x18000, scoped, tag = 'input window, operand 1, single buffered']
    #allocation6 [shape = 's32[1]{0}', space=sflag, size = 0x4, scoped, tag = 'scoped memory for tpu_custom_call.1']
    #allocation7 [shape = 'u8[32768]{0}', space=vmem, size = 0x8000, scoped, tag = 'input window, operand 2, single buffered']
    #allocation8 [shape = 'u8[32768]{0}', space=vmem, size = 0x8000, scoped, tag = 'input window, operand 4, single buffered']
    #allocation9 [shape = 's32[1]{0}', space=sflag, size = 0x4, scoped, tag = 'scoped memory for tpu_custom_call.1']
    #allocation10 [shape = 'u8[8192]{0}', space=vmem, size = 0x2000, scoped, tag = 'output window, operand 0, single buffered']
    %11 = vsyncpa [#allocation3], 0
    %12 = vsyncpa [#allocation6], 0
    %13 = vsyncpa [#allocation9], 0
    %14 = vsyncpa [#allocation4], 0
    // Predicated region
    $region2: #{tpu_custom_call.1} parent=1 // pred_check
      _
    $region3: #{tpu_custom_call.1} parent=1 // pred_check_branch
      %16 = sbr.rel (0) target = $region5
    $region4: #{tpu_custom_call.1} parent=1 // pred_region
      %s18 = ssub.s32 128, 128
      %19 = vsyncadd [#allocation3], %s18
      %s20 = sshll.u32 [#allocation2], 4
      %s21 = int_to_ptr.vmem [resolvable:$true] %s20
      %26 = dma.hbm_to_vmem [thread:$0]  %s0, 128, %s21, [#allocation3], 64, 64, 4
    $region5: #{tpu_custom_call.1} parent=1 // pred_fallthru
      _
    // Predicated region
    $region6: #{tpu_custom_call.1} parent=1 // pred_check
      _
    $region7: #{tpu_custom_call.1} parent=1 // pred_check_branch
      %28 = sbr.rel (0) target = $region9
    $region8: #{tpu_custom_call.1} parent=1 // pred_region
      %s30 = ssub.s32 3072, 3072
      %31 = vsyncadd [#allocation6], %s30
      %s32 = sshll.u32 [#allocation5], 4
      %s33 = int_to_ptr.vmem [resolvable:$true] %s32
      %38 = dma.hbm_to_vmem [thread:$0]  %s1, 3072, %s33, [#allocation6], 192, 192, 12
    $region9: #{tpu_custom_call.1} parent=1 // pred_fallthru
      _
    // Predicated region
    $region10: #{tpu_custom_call.1} parent=1 // pred_check
      _
    $region11: #{tpu_custom_call.1} parent=1 // pred_check_branch
      %40 = sbr.rel (0) target = $region13
    $region12: #{tpu_custom_call.1} parent=1 // pred_region
      %s42 = ssub.s32 1024, 1024
      %43 = vsyncadd [#allocation6], %s42
      %s44 = sshll.u32 [#allocation7], 4
      %s45 = int_to_ptr.vmem [resolvable:$true] %s44
      %50 = dma.hbm_to_vmem [thread:$0]  %s2, 1024, %s45, [#allocation6], 64, 64, 4
    $region13: #{tpu_custom_call.1} parent=1 // pred_fallthru
      _
    // Predicated region
    $region14: #{tpu_custom_call.1} parent=1 // pred_check
      _
    $region15: #{tpu_custom_call.1} parent=1 // pred_check_branch
      %52 = sbr.rel (0) target = $region17
    $region16: #{tpu_custom_call.1} parent=1 // pred_region
      _
    $region17: #{tpu_custom_call.1} parent=1 // pred_fallthru
      _
    // Predicated region
    $region18: #{tpu_custom_call.1} parent=1 // pred_check
      _
    $region19: #{tpu_custom_call.1} parent=1 // pred_check_branch
      %54 = sbr.rel (0) target = $region21
    $region20: #{tpu_custom_call.1} parent=1 // pred_region
      %s56 = ssub.s32 1024, 1024
      %57 = vsyncadd [#allocation9], %s56
      %s58 = sshll.u32 [#allocation8], 4
      %s59 = int_to_ptr.vmem [resolvable:$true] %s58
      %64 = dma.hbm_to_vmem [thread:$0]  %s4, 1024, %s59, [#allocation9], 64, 64, 4
    $region21: #{tpu_custom_call.1} parent=1 // pred_fallthru
      _
    // Predicated region
    $region22: #{tpu_custom_call.1} parent=1 // pred_check
      _
    $region23: #{tpu_custom_call.1} parent=1 // pred_check_branch
      %66 = sbr.rel (0) target = $region25
    $region24: #{tpu_custom_call.1} parent=1 // pred_region
      _
    $region25: #{tpu_custom_call.1} parent=1 // pred_fallthru
      _
    // Predicated region
    $region26: #{tpu_custom_call.1} parent=1 // pred_check
      _
    $region27: #{tpu_custom_call.1} parent=1 // pred_check_branch
      %68 = sbr.rel (0) target = $region29
    $region28: #{tpu_custom_call.1} parent=1 // pred_region
      %69 = dma.done [#allocation3], 128
    $region29: #{tpu_custom_call.1} parent=1 // pred_fallthru
      _
    // Predicated region
    $region30: #{tpu_custom_call.1} parent=1 // pred_check
      _
    $region31: #{tpu_custom_call.1} parent=1 // pred_check_branch
      %71 = sbr.rel (0) target = $region33
    $region32: #{tpu_custom_call.1} parent=1 // pred_region
      %72 = dma.done [#allocation6], 3072
    $region33: #{tpu_custom_call.1} parent=1 // pred_fallthru
      _
    // Predicated region
    $region34: #{tpu_custom_call.1} parent=1 // pred_check
      _
    $region35: #{tpu_custom_call.1} parent=1 // pred_check_branch
      %74 = sbr.rel (0) target = $region37
    $region36: #{tpu_custom_call.1} parent=1 // pred_region
      %75 = dma.done [#allocation6], 1024
    $region37: #{tpu_custom_call.1} parent=1 // pred_fallthru
      _
    // Predicated region
    $region38: #{tpu_custom_call.1} parent=1 // pred_check
      _
    $region39: #{tpu_custom_call.1} parent=1 // pred_check_branch
      %77 = sbr.rel (0) target = $region41
    $region40: #{tpu_custom_call.1} parent=1 // pred_region
      %78 = dma.done [#allocation9], 1024
    $region41: #{tpu_custom_call.1} parent=1 // pred_fallthru
      _
    %v80 = vld [vmem:[#allocation2] sm:$0xf]
    %v81 = vld [vmem:[#allocation2 + $0x4] sm:$0xf]
    %v82 = vld [vmem:[#allocation5] sm:$0xff]
    %v83 = vld [vmem:[#allocation5 + $0x8] sm:$0xf]
    %v84 = vld [vmem:[#allocation5 + $0xc] sm:$0xff]
    %v85 = vld [vmem:[#allocation5 + $0x14] sm:$0xf]
    %v86 = vld [vmem:[#allocation5 + $0x18] sm:$0xff]
    %v87 = vld [vmem:[#allocation5 + $0x20] sm:$0xf]
    %v88 = vld [vmem:[#allocation5 + $0x24] sm:$0xff]
    %v89 = vld [vmem:[#allocation5 + $0x2c] sm:$0xf]
    %v90 = vld [vmem:[#allocation5 + $0x30] sm:$0xff]
    %v91 = vld [vmem:[#allocation5 + $0x38] sm:$0xf]
    %v92 = vld [vmem:[#allocation5 + $0x3c] sm:$0xff]
    %v93 = vld [vmem:[#allocation5 + $0x44] sm:$0xf]
    %v94 = vld [vmem:[#allocation5 + $0x48] sm:$0xff]
    %v95 = vld [vmem:[#allocation5 + $0x50] sm:$0xf]
    %v96 = vld [vmem:[#allocation5 + $0x54] sm:$0xff]
    %v97 = vld [vmem:[#allocation5 + $0x5c] sm:$0xf]
    %v98 = vld [vmem:[#allocation5 + $0x60] sm:$0xff]
    %v99 = vld [vmem:[#allocation5 + $0x68] sm:$0xf]
    %v100 = vld [vmem:[#allocation5 + $0x6c] sm:$0xff]
    %v101 = vld [vmem:[#allocation5 + $0x74] sm:$0xf]
    %v102 = vld [vmem:[#allocation5 + $0x78] sm:$0xff]
    %v103 = vld [vmem:[#allocation5 + $0x80] sm:$0xf]
    %v104 = vld [vmem:[#allocation5 + $0x84] sm:$0xff]
    %v105 = vld [vmem:[#allocation5 + $0x8c] sm:$0xf]
    %v106 = vld [vmem:[#allocation5 + $0x90] sm:$0xff]
    %v107 = vld [vmem:[#allocation5 + $0x98] sm:$0xf]
    %v108 = vld [vmem:[#allocation5 + $0x9c] sm:$0xff]
    %v109 = vld [vmem:[#allocation5 + $0xa4] sm:$0xf]
    %v110 = vld [vmem:[#allocation5 + $0xa8] sm:$0xff]
    %v111 = vld [vmem:[#allocation5 + $0xb0] sm:$0xf]
    %v112 = vld [vmem:[#allocation5 + $0xb4] sm:$0xff]
    %v113 = vld [vmem:[#allocation5 + $0xbc] sm:$0xf]
    %v116 = vunpack.c.l.b16 %v80
    %v117 = vunpack.c.l.b16 %v81
    %v118 = vpack.c.b16 %v117, %v116
    %v152 = vunpack.c.l.b16 %v82
    %v153 = vunpack.c.h.b16 %v82
    %v154 = vunpack.c.l.b16 %v83
    %v155 = vunpack.c.l.b16 %v84
    %v156 = vunpack.c.h.b16 %v84
    %v157 = vunpack.c.l.b16 %v85
    %v158 = vunpack.c.l.b16 %v86
    %v159 = vunpack.c.h.b16 %v86
    %v160 = vunpack.c.l.b16 %v87
    %v161 = vunpack.c.l.b16 %v88
    %v162 = vunpack.c.h.b16 %v88
    %v163 = vunpack.c.l.b16 %v89
    %v164 = vunpack.c.l.b16 %v90
    %v165 = vunpack.c.h.b16 %v90
    %v166 = vunpack.c.l.b16 %v91
    %v167 = vunpack.c.l.b16 %v92
    %v168 = vunpack.c.h.b16 %v92
    %v169 = vunpack.c.l.b16 %v93
    %v170 = vunpack.c.l.b16 %v94
    %v171 = vunpack.c.h.b16 %v94
    %v172 = vunpack.c.l.b16 %v95
    %v173 = vunpack.c.l.b16 %v96
    %v174 = vunpack.c.h.b16 %v96
    %v175 = vunpack.c.l.b16 %v97
    %v176 = vunpack.c.l.b16 %v98
    %v177 = vunpack.c.h.b16 %v98
    %v178 = vunpack.c.l.b16 %v99
    %v179 = vunpack.c.l.b16 %v100
    %v180 = vunpack.c.h.b16 %v100
    %v181 = vunpack.c.l.b16 %v101
    %v182 = vunpack.c.l.b16 %v102
    %v183 = vunpack.c.h.b16 %v102
    %v184 = vunpack.c.l.b16 %v103
    %v185 = vunpack.c.l.b16 %v104
    %v186 = vunpack.c.h.b16 %v104
    %v187 = vunpack.c.l.b16 %v105
    %v188 = vunpack.c.l.b16 %v106
    %v189 = vunpack.c.h.b16 %v106
    %v190 = vunpack.c.l.b16 %v107
    %v191 = vunpack.c.l.b16 %v108
    %v192 = vunpack.c.h.b16 %v108
    %v193 = vunpack.c.l.b16 %v109
    %v194 = vunpack.c.l.b16 %v110
    %v195 = vunpack.c.h.b16 %v110
    %v196 = vunpack.c.l.b16 %v111
    %v197 = vunpack.c.l.b16 %v112
    %v198 = vunpack.c.h.b16 %v112
    %v199 = vunpack.c.l.b16 %v113
    %v200 = vpack.c.b16 %v155, %v152
    %v201 = vpack.c.b16 %v156, %v153
    %v202 = vpack.c.b16 %v157, %v154
    %v203 = vpack.c.b16 %v161, %v158
    %v204 = vpack.c.b16 %v162, %v159
    %v205 = vpack.c.b16 %v163, %v160
    %v206 = vpack.c.b16 %v167, %v164
    %v207 = vpack.c.b16 %v168, %v165
    %v208 = vpack.c.b16 %v169, %v166
    %v209 = vpack.c.b16 %v173, %v170
    %v210 = vpack.c.b16 %v174, %v171
    %v211 = vpack.c.b16 %v175, %v172
    %v212 = vpack.c.b16 %v179, %v176
    %v213 = vpack.c.b16 %v180, %v177
    %v214 = vpack.c.b16 %v181, %v178
    %v215 = vpack.c.b16 %v185, %v182
    %v216 = vpack.c.b16 %v186, %v183
    %v217 = vpack.c.b16 %v187, %v184
    %v218 = vpack.c.b16 %v191, %v188
    %v219 = vpack.c.b16 %v192, %v189
    %v220 = vpack.c.b16 %v193, %v190
    %v221 = vpack.c.b16 %v197, %v194
    %v222 = vpack.c.b16 %v198, %v195
    %v223 = vpack.c.b16 %v199, %v196
    %248 = vmatprep.subr.bf16.mxu0 %v201
    %249 = vmatpush1.bf16.msra.mxu0 %v200
    %250 = vmatprep.subr.bf16.mxu0 %v204
    %251 = vmatpush1.bf16.msra.mxu0 %v203
    %252 = vmatprep.subr.bf16.mxu0 %v207
    %253 = vmatpush1.bf16.msra.mxu0 %v206
    %254 = vmatprep.subr.bf16.mxu0 %v210
    %255 = vmatpush1.bf16.msra.mxu0 %v209
    %256 = vmatprep.subr.bf16.mxu0 %v213
    %257 = vmatpush1.bf16.msra.mxu0 %v212
    %258 = vmatprep.subr.bf16.mxu0 %v216
    %259 = vmatpush1.bf16.msra.mxu0 %v215
    %260 = vmatprep.subr.bf16.mxu0 %v219
    %261 = vmatpush1.bf16.msra.mxu0 %v218
    %262 = vmatprep.subr.bf16.mxu0 %v222
    %263 = vmatpush1.bf16.msra.mxu0 %v221
    %264 = vmatprep.subr.bf16.mxu0 0
    %265 = vmatpush1.bf16.msra.mxu0 0
    %266 = vmatprep.subr.bf16.mxu0 0
    %267 = vmatpush1.bf16.msra.mxu0 0
    %268 = vmatprep.subr.bf16.mxu0 0
    %269 = vmatpush1.bf16.msra.mxu0 0
    %270 = vmatprep.subr.bf16.mxu0 0
    %271 = vmatpush1.bf16.msra.mxu0 0
    %272 = vmatprep.subr.bf16.mxu0 0
    %273 = vmatpush1.bf16.msra.mxu0 0
    %274 = vmatprep.subr.bf16.mxu0 0
    %275 = vmatpush1.bf16.msra.mxu0 0
    %276 = vmatprep.subr.bf16.mxu0 0
    %277 = vmatpush1.bf16.msra.mxu0 0
    %278 = vmatprep.subr.bf16.mxu0 0
    %279 = vmatpush1.bf16.msra.mxu0 0
    %280 = vmatprep.mubr.bf16.mxu0 0
    %281 = vmatmul.mubr.bf16.gmra.mrb[0].mxu0 %v118
    %v282 = vpop.f32.mrb[0].mxu0
    %v283 = vadd.f32 0.0, %v282
    %v284 = vpop.f32.mrb[0].mxu0
    %v285 = vadd.f32 0.0, %v284
    %v286 = vpop.f32.mrb[0].mxu0
    %v287 = vadd.f32 0.0, %v286
    %v288 = vpop.f32.mrb[0].mxu0
    %v289 = vadd.f32 0.0, %v288
    %290 = vdwg.mxu0
    %291 = vmatprep.subr.bf16.mxu0 0
    %292 = vmatpush1.bf16.msra.mxu0 %v202
    %293 = vmatprep.subr.bf16.mxu0 0
    %294 = vmatpush1.bf16.msra.mxu0 %v205
    %295 = vmatprep.subr.bf16.mxu0 0
    %296 = vmatpush1.bf16.msra.mxu0 %v208
    %297 = vmatprep.subr.bf16.mxu0 0
    %298 = vmatpush1.bf16.msra.mxu0 %v211
    %299 = vmatprep.subr.bf16.mxu0 0
    %300 = vmatpush1.bf16.msra.mxu0 %v214
    %301 = vmatprep.subr.bf16.mxu0 0
    %302 = vmatpush1.bf16.msra.mxu0 %v217
    %303 = vmatprep.subr.bf16.mxu0 0
    %304 = vmatpush1.bf16.msra.mxu0 %v220
    %305 = vmatprep.subr.bf16.mxu0 0
    %306 = vmatpush1.bf16.msra.mxu0 %v223
    %307 = vmatprep.subr.bf16.mxu0 0
    %308 = vmatpush1.bf16.msra.mxu0 0
    %309 = vmatprep.subr.bf16.mxu0 0
    %310 = vmatpush1.bf16.msra.mxu0 0
    %311 = vmatprep.subr.bf16.mxu0 0
    %312 = vmatpush1.bf16.msra.mxu0 0
    %313 = vmatprep.subr.bf16.mxu0 0
    %314 = vmatpush1.bf16.msra.mxu0 0
    %315 = vmatprep.subr.bf16.mxu0 0
    %316 = vmatpush1.bf16.msra.mxu0 0
    %317 = vmatprep.subr.bf16.mxu0 0
    %318 = vmatpush1.bf16.msra.mxu0 0
    %319 = vmatprep.subr.bf16.mxu0 0
    %320 = vmatpush1.bf16.msra.mxu0 0
    %321 = vmatprep.subr.bf16.mxu0 0
    %322 = vmatpush1.bf16.msra.mxu0 0
    %323 = vmatprep.mubr.bf16.mxu0 0
    %324 = vmatmul.mubr.bf16.gmra.mrb[0].mxu0 %v118
    %v325 = vpop.f32.mrb[0].mxu0
    %v326 = vadd.f32 0.0, %v325
    %v327 = vpop.f32.mrb[0].mxu0
    %v328 = vpop.f32.mrb[0].mxu0
    %v329 = vadd.f32 0.0, %v328
    %v330 = vpop.f32.mrb[0].mxu0
    %331 = vdwg.mxu0
    %v332 = vpack.c.bf16 %v283, %v283
    %v333 = vpack.c.bf16 %v287, %v287
    %v334 = vpack.c.bf16 %v285, %v285
    %v335 = vpack.c.bf16 %v289, %v289
    %v336 = vpack.c.bf16 %v326, %v326
    %v337 = vpack.c.bf16 %v329, %v329
    %338 = vmatprep.subr.bf16.mxu0 0
    %339 = vmatpush1.bf16.xpose.msra.mxu0 %v334
    %340 = vmatprep.subr.bf16.mxu0 0
    %341 = vmatpush1.bf16.xpose.msra.mxu0 0
    %342 = vmatprep.subr.bf16.mxu0 0
    %343 = vmatpush1.bf16.xpose.msra.mxu0 0
    %344 = vmatprep.subr.bf16.mxu0 0
    %345 = vmatpush1.bf16.xpose.msra.mxu0 0
    %346 = vmatprep.subr.bf16.mxu0 0
    %347 = vmatpush1.bf16.xpose.msra.mxu0 0
    %348 = vmatprep.subr.bf16.mxu0 0
    %349 = vmatpush1.bf16.xpose.msra.mxu0 0
    %350 = vmatprep.subr.bf16.mxu0 0
    %351 = vmatpush1.bf16.xpose.msra.mxu0 0
    %352 = vmatprep.subr.bf16.mxu0 0
    %353 = vmatpush1.bf16.xpose.msra.mxu0 0
    %354 = vmatprep.subr.bf16.mxu0 0
    %355 = vmatpush1.bf16.xpose.msra.mxu0 0
    %356 = vmatprep.subr.bf16.mxu0 0
    %357 = vmatpush1.bf16.xpose.msra.mxu0 0
    %358 = vmatprep.subr.bf16.mxu0 0
    %359 = vmatpush1.bf16.xpose.msra.mxu0 0
    %360 = vmatprep.subr.bf16.mxu0 0
    %361 = vmatpush1.bf16.xpose.msra.mxu0 0
    %362 = vmatprep.subr.bf16.mxu0 0
    %363 = vmatpush1.bf16.xpose.msra.mxu0 0
    %364 = vmatprep.subr.bf16.mxu0 0
    %365 = vmatpush1.bf16.xpose.msra.mxu0 0
    %366 = vmatprep.subr.bf16.mxu0 0
    %367 = vmatpush1.bf16.xpose.msra.mxu0 0
    %368 = vmatprep.subr.bf16.mxu0 0
    %369 = vmatpush1.bf16.xpose.msra.mxu0 0
    %370 = vmatprep.mubr.bf16.mxu0 0
    %371 = vmatmul.mubr.bf16.gmra.mrb[0].mxu0 %v332
    %v372 = vpop.f32.mrb[0].mxu0
    %v373 = vadd.f32 0.0, %v372
    %v374 = vpop.f32.mrb[0].mxu0
    %v375 = vpop.f32.mrb[0].mxu0
    %v376 = vpop.f32.mrb[0].mxu0
    %377 = vdwg.mxu0
    %378 = vmatprep.subr.bf16.mxu0 0
    %379 = vmatpush1.bf16.xpose.msra.mxu0 %v335
    %380 = vmatprep.subr.bf16.mxu0 0
    %381 = vmatpush1.bf16.xpose.msra.mxu0 0
    %382 = vmatprep.subr.bf16.mxu0 0
    %383 = vmatpush1.bf16.xpose.msra.mxu0 0
    %384 = vmatprep.subr.bf16.mxu0 0
    %385 = vmatpush1.bf16.xpose.msra.mxu0 0
    %386 = vmatprep.subr.bf16.mxu0 0
    %387 = vmatpush1.bf16.xpose.msra.mxu0 0
    %388 = vmatprep.subr.bf16.mxu0 0
    %389 = vmatpush1.bf16.xpose.msra.mxu0 0
    %390 = vmatprep.subr.bf16.mxu0 0
    %391 = vmatpush1.bf16.xpose.msra.mxu0 0
    %392 = vmatprep.subr.bf16.mxu0 0
    %393 = vmatpush1.bf16.xpose.msra.mxu0 0
    %394 = vmatprep.subr.bf16.mxu0 0
    %395 = vmatpush1.bf16.xpose.msra.mxu0 0
    %396 = vmatprep.subr.bf16.mxu0 0
    %397 = vmatpush1.bf16.xpose.msra.mxu0 0
    %398 = vmatprep.subr.bf16.mxu0 0
    %399 = vmatpush1.bf16.xpose.msra.mxu0 0
    %400 = vmatprep.subr.bf16.mxu0 0
    %401 = vmatpush1.bf16.xpose.msra.mxu0 0
    %402 = vmatprep.subr.bf16.mxu0 0
    %403 = vmatpush1.bf16.xpose.msra.mxu0 0
    %404 = vmatprep.subr.bf16.mxu0 0
    %405 = vmatpush1.bf16.xpose.msra.mxu0 0
    %406 = vmatprep.subr.bf16.mxu0 0
    %407 = vmatpush1.bf16.xpose.msra.mxu0 0
    %408 = vmatprep.subr.bf16.mxu0 0
    %409 = vmatpush1.bf16.xpose.msra.mxu0 0
    %410 = vmatprep.mubr.bf16.mxu0 0
    %411 = vmatmul.mubr.bf16.gmra.mrb[0].mxu0 %v333
    %v412 = vpop.f32.mrb[0].mxu0
    %v413 = vadd.f32 0.0, %v412
    %v414 = vpop.f32.mrb[0].mxu0
    %v415 = vpop.f32.mrb[0].mxu0
    %v416 = vpop.f32.mrb[0].mxu0
    %417 = vdwg.mxu0
    %v418 = vlaneseq
    %v419 = vshrl.u32 %v418, 7
    %v420 = vlaneseq
    %v421 = vand.u32 %v420, 127
    %vm422 = vcmp.gt.s32.totalorder %v421, %v419
    %v423 = vsel %vm422, -1e+30, %v373
    %v424 = vsel %vm422, -1e+30, %v413
    %vm425 = vcmask 64512
    %v426 = vsel %vm425, %v423, -inf
    %427 = vmax.xlane.f32.xlu0 %v426
    %v428 = vpop.xlane.xlu0 %427
    %v429 = vsel %vm425, %v424, -inf
    %430 = vmax.xlane.f32.xlu0 %v429
    %v431 = vpop.xlane.xlu0 %430
    %v432 = vsub.f32 %v423, %v428
    %v433 = vsub.f32 %v424, %v431
    %v434 = vmul.f32 %v432, 1.442695
    %v435 = vpow.pop %v434
    %v436 = vmul.f32 %v433, 1.442695
    %v437 = vpow.pop %v436
    %v438 = vsel %vm425, %v435, 0.0
    %439 = vadd.xlane.f32.xlu0 %v438
    %v440 = vpop.xlane.xlu0 %439
    %v441 = vsel %vm425, %v437, 0.0
    %442 = vadd.xlane.f32.xlu0 %v441
    %v443 = vpop.xlane.xlu0 %442
    %v444 = vrcp.pop %v440
    %v445 = vrcp.pop %v443
    %v446 = vmul.f32 %v435, %v444
    %v447 = vmul.f32 %v437, %v445
    %v448 = vpack.c.bf16 %v446, %v446
    %v449 = vpack.c.bf16 %v447, %v447
    %v451 = vsel %vm425, %v448, 0
    %vm453 = vcmask 1043456
    %v455 = vsel %vm453, %v336, 0
    %457 = vmatprep.subr.bf16.mxu0 0
    %458 = vmatpush1.bf16.msra.mxu0 %v455
    %459 = vmatprep.subr.bf16.mxu0 0
    %460 = vmatpush1.bf16.msra.mxu0 0
    %461 = vmatprep.subr.bf16.mxu0 0
    %462 = vmatpush1.bf16.msra.mxu0 0
    %463 = vmatprep.subr.bf16.mxu0 0
    %464 = vmatpush1.bf16.msra.mxu0 0
    %465 = vmatprep.subr.bf16.mxu0 0
    %466 = vmatpush1.bf16.msra.mxu0 0
    %467 = vmatprep.subr.bf16.mxu0 0
    %468 = vmatpush1.bf16.msra.mxu0 0
    %469 = vmatprep.subr.bf16.mxu0 0
    %470 = vmatpush1.bf16.msra.mxu0 0
    %471 = vmatprep.subr.bf16.mxu0 0
    %472 = vmatpush1.bf16.msra.mxu0 0
    %473 = vmatprep.subr.bf16.mxu0 0
    %474 = vmatpush1.bf16.msra.mxu0 0
    %475 = vmatprep.subr.bf16.mxu0 0
    %476 = vmatpush1.bf16.msra.mxu0 0
    %477 = vmatprep.subr.bf16.mxu0 0
    %478 = vmatpush1.bf16.msra.mxu0 0
    %479 = vmatprep.subr.bf16.mxu0 0
    %480 = vmatpush1.bf16.msra.mxu0 0
    %481 = vmatprep.subr.bf16.mxu0 0
    %482 = vmatpush1.bf16.msra.mxu0 0
    %483 = vmatprep.subr.bf16.mxu0 0
    %484 = vmatpush1.bf16.msra.mxu0 0
    %485 = vmatprep.subr.bf16.mxu0 0
    %486 = vmatpush1.bf16.msra.mxu0 0
    %487 = vmatprep.subr.bf16.mxu0 0
    %488 = vmatpush1.bf16.msra.mxu0 0
    %489 = vmatprep.mubr.bf16.mxu0 0
    %490 = vmatmul.mubr.bf16.gmra.mrb[0].mxu0 %v451
    %v491 = vpop.f32.mrb[0].mxu0
    %v492 = vadd.f32 0.0, %v491
    %v493 = vpop.f32.mrb[0].mxu0
    %v494 = vpop.f32.mrb[0].mxu0
    %v495 = vpop.f32.mrb[0].mxu0
    %496 = vdwg.mxu0
    %v498 = vsel %vm425, %v449, 0
    %v501 = vsel %vm453, %v337, 0
    %503 = vmatprep.subr.bf16.mxu0 0
    %504 = vmatpush1.bf16.msra.mxu0 %v501
    %505 = vmatprep.subr.bf16.mxu0 0
    %506 = vmatpush1.bf16.msra.mxu0 0
    %507 = vmatprep.subr.bf16.mxu0 0
    %508 = vmatpush1.bf16.msra.mxu0 0
    %509 = vmatprep.subr.bf16.mxu0 0
    %510 = vmatpush1.bf16.msra.mxu0 0
    %511 = vmatprep.subr.bf16.mxu0 0
    %512 = vmatpush1.bf16.msra.mxu0 0
    %513 = vmatprep.subr.bf16.mxu0 0
    %514 = vmatpush1.bf16.msra.mxu0 0
    %515 = vmatprep.subr.bf16.mxu0 0
    %516 = vmatpush1.bf16.msra.mxu0 0
    %517 = vmatprep.subr.bf16.mxu0 0
    %518 = vmatpush1.bf16.msra.mxu0 0
    %519 = vmatprep.subr.bf16.mxu0 0
    %520 = vmatpush1.bf16.msra.mxu0 0
    %521 = vmatprep.subr.bf16.mxu0 0
    %522 = vmatpush1.bf16.msra.mxu0 0
    %523 = vmatprep.subr.bf16.mxu0 0
    %524 = vmatpush1.bf16.msra.mxu0 0
    %525 = vmatprep.subr.bf16.mxu0 0
    %526 = vmatpush1.bf16.msra.mxu0 0
    %527 = vmatprep.subr.bf16.mxu0 0
    %528 = vmatpush1.bf16.msra.mxu0 0
    %529 = vmatprep.subr.bf16.mxu0 0
    %530 = vmatpush1.bf16.msra.mxu0 0
    %531 = vmatprep.subr.bf16.mxu0 0
    %532 = vmatpush1.bf16.msra.mxu0 0
    %533 = vmatprep.subr.bf16.mxu0 0
    %534 = vmatpush1.bf16.msra.mxu0 0
    %535 = vmatprep.mubr.bf16.mxu0 0
    %536 = vmatmul.mubr.bf16.gmra.mrb[0].mxu0 %v498
    %v537 = vpop.f32.mrb[0].mxu0
    %v538 = vadd.f32 0.0, %v537
    %v539 = vpop.f32.mrb[0].mxu0
    %v540 = vpop.f32.mrb[0].mxu0
    %v541 = vpop.f32.mrb[0].mxu0
    %542 = vdwg.mxu0
    %543 = vadd.xlane.f32.xlu0 %v492
    %v544 = vpop.xlane.xlu0 %543
    %545 = vadd.xlane.f32.xlu0 %v538
    %v546 = vpop.xlane.xlu0 %545
    %v547 = vmul.f32 %v544, 0.03125
    %v548 = vmul.f32 %v546, 0.03125
    %v549 = vmul.f32 %v492, %v492
    %v550 = vmul.f32 %v538, %v538
    %551 = vadd.xlane.f32.xlu0 %v549
    %v552 = vpop.xlane.xlu0 %551
    %553 = vadd.xlane.f32.xlu0 %v550
    %v554 = vpop.xlane.xlu0 %553
    %v555 = vmul.f32 %v552, 0.03125
    %v556 = vmul.f32 %v554, 0.03125
    %v557 = vmul.f32 %v547, %v547
    %v558 = vmul.f32 %v548, %v548
    %v559 = vsub.f32 %v555, %v557
    %v560 = vsub.f32 %v556, %v558
    %v561 = vsub.f32 %v492, %v547
    %v562 = vsub.f32 %v538, %v548
    %v563 = vadd.f32 %v559, 1e-05
    %v564 = vadd.f32 %v560, 1e-05
    %v565 = vrsqrt.pop %v563
    %v566 = vrsqrt.pop %v564
    %v567 = vmul.f32 %v561, %v565
    %v568 = vmul.f32 %v562, %v566
    %v569 = vpack.c.bf16 %v568, %v567
    %v570 = vld [vmem:[#allocation7] sm:$0xf]
    %v571 = vld [vmem:[#allocation7 + $0x4] sm:$0xf]
    %v572 = vld [vmem:[#allocation7 + $0x8] sm:$0xf]
    %v573 = vld [vmem:[#allocation7 + $0xc] sm:$0xf]
    %v574 = vld [vmem:[#allocation7 + $0x10] sm:$0xf]
    %v575 = vld [vmem:[#allocation7 + $0x14] sm:$0xf]
    %v576 = vld [vmem:[#allocation7 + $0x18] sm:$0xf]
    %v577 = vld [vmem:[#allocation7 + $0x1c] sm:$0xf]
    %v578 = vld [vmem:[#allocation7 + $0x20] sm:$0xf]
    %v579 = vld [vmem:[#allocation7 + $0x24] sm:$0xf]
    %v580 = vld [vmem:[#allocation7 + $0x28] sm:$0xf]
    %v581 = vld [vmem:[#allocation7 + $0x2c] sm:$0xf]
    %v582 = vld [vmem:[#allocation7 + $0x30] sm:$0xf]
    %v583 = vld [vmem:[#allocation7 + $0x34] sm:$0xf]
    %v584 = vld [vmem:[#allocation7 + $0x38] sm:$0xf]
    %v585 = vld [vmem:[#allocation7 + $0x3c] sm:$0xf]
    %v586 = vld [vmem:[%s3] sm:$0x1]
    %v588 = vlaneseq
    %v589 = vshrl.u32 %v588, 7
    %v590 = vsub.s32 0, %v589
    %v591 = vrot.slane %v586, %v590
    %v609 = vunpack.c.l.b16 %v570
    %v610 = vunpack.c.l.b16 %v571
    %v611 = vunpack.c.l.b16 %v572
    %v612 = vunpack.c.l.b16 %v573
    %v613 = vunpack.c.l.b16 %v574
    %v614 = vunpack.c.l.b16 %v575
    %v615 = vunpack.c.l.b16 %v576
    %v616 = vunpack.c.l.b16 %v577
    %v617 = vunpack.c.l.b16 %v578
    %v618 = vunpack.c.l.b16 %v579
    %v619 = vunpack.c.l.b16 %v580
    %v620 = vunpack.c.l.b16 %v581
    %v621 = vunpack.c.l.b16 %v582
    %v622 = vunpack.c.l.b16 %v583
    %v623 = vunpack.c.l.b16 %v584
    %v624 = vunpack.c.l.b16 %v585
    %v625 = vpack.c.b16 %v610, %v609
    %v626 = vpack.c.b16 %v612, %v611
    %v627 = vpack.c.b16 %v614, %v613
    %v628 = vpack.c.b16 %v616, %v615
    %v629 = vpack.c.b16 %v618, %v617
    %v630 = vpack.c.b16 %v620, %v619
    %v631 = vpack.c.b16 %v622, %v621
    %v632 = vpack.c.b16 %v624, %v623
    %641 = vmatprep.subr.bf16.mxu0 0
    %642 = vmatpush1.bf16.msra.mxu0 %v625
    %643 = vmatprep.subr.bf16.mxu0 0
    %644 = vmatpush1.bf16.msra.mxu0 %v626
    %645 = vmatprep.subr.bf16.mxu0 0
    %646 = vmatpush1.bf16.msra.mxu0 %v627
    %647 = vmatprep.subr.bf16.mxu0 0
    %648 = vmatpush1.bf16.msra.mxu0 %v628
    %649 = vmatprep.subr.bf16.mxu0 0
    %650 = vmatpush1.bf16.msra.mxu0 %v629
    %651 = vmatprep.subr.bf16.mxu0 0
    %652 = vmatpush1.bf16.msra.mxu0 %v630
    %653 = vmatprep.subr.bf16.mxu0 0
    %654 = vmatpush1.bf16.msra.mxu0 %v631
    %655 = vmatprep.subr.bf16.mxu0 0
    %656 = vmatpush1.bf16.msra.mxu0 %v632
    %657 = vmatprep.subr.bf16.mxu0 0
    %658 = vmatpush1.bf16.msra.mxu0 0
    %659 = vmatprep.subr.bf16.mxu0 0
    %660 = vmatpush1.bf16.msra.mxu0 0
    %661 = vmatprep.subr.bf16.mxu0 0
    %662 = vmatpush1.bf16.msra.mxu0 0
    %663 = vmatprep.subr.bf16.mxu0 0
    %664 = vmatpush1.bf16.msra.mxu0 0
    %665 = vmatprep.subr.bf16.mxu0 0
    %666 = vmatpush1.bf16.msra.mxu0 0
    %667 = vmatprep.subr.bf16.mxu0 0
    %668 = vmatpush1.bf16.msra.mxu0 0
    %669 = vmatprep.subr.bf16.mxu0 0
    %670 = vmatpush1.bf16.msra.mxu0 0
    %671 = vmatprep.subr.bf16.mxu0 0
    %672 = vmatpush1.bf16.msra.mxu0 0
    %673 = vmatprep.mubr.bf16.mxu0 0
    %674 = vmatmul.mubr.bf16.gmra.mrb[0].mxu0 %v569
    %v675 = vpop.f32.mrb[0].mxu0
    %v676 = vadd.f32 %v591, %v675
    %v677 = vpop.f32.mrb[0].mxu0
    %v678 = vpop.f32.mrb[0].mxu0
    %v679 = vadd.f32 %v591, %v678
    %v680 = vpop.f32.mrb[0].mxu0
    %681 = vdwg.mxu0
    %v682 = vmax.f32 %v676, 0.0
    %v683 = vmax.f32 %v679, 0.0
    %v684 = vpack.c.bf16 %v683, %v682
    %v685 = vld [vmem:[#allocation8] sm:$0xf]
    %v686 = vld [vmem:[#allocation8 + $0x4] sm:$0xf]
    %v687 = vld [vmem:[#allocation8 + $0x8] sm:$0xf]
    %v688 = vld [vmem:[#allocation8 + $0xc] sm:$0xf]
    %v689 = vld [vmem:[#allocation8 + $0x10] sm:$0xf]
    %v690 = vld [vmem:[#allocation8 + $0x14] sm:$0xf]
    %v691 = vld [vmem:[#allocation8 + $0x18] sm:$0xf]
    %v692 = vld [vmem:[#allocation8 + $0x1c] sm:$0xf]
    %v693 = vld [vmem:[#allocation8 + $0x20] sm:$0xf]
    %v694 = vld [vmem:[#allocation8 + $0x24] sm:$0xf]
    %v695 = vld [vmem:[#allocation8 + $0x28] sm:$0xf]
    %v696 = vld [vmem:[#allocation8 + $0x2c] sm:$0xf]
    %v697 = vld [vmem:[#allocation8 + $0x30] sm:$0xf]
    %v698 = vld [vmem:[#allocation8 + $0x34] sm:$0xf]
    %v699 = vld [vmem:[#allocation8 + $0x38] sm:$0xf]
    %v700 = vld [vmem:[#allocation8 + $0x3c] sm:$0xf]
    %v701 = vld [vmem:[%s5] sm:$0x1]
    %v703 = vlaneseq
    %v704 = vshrl.u32 %v703, 7
    %v705 = vsub.s32 0, %v704
    %v706 = vrot.slane %v701, %v705
    %v724 = vunpack.c.l.b16 %v685
    %v725 = vunpack.c.l.b16 %v686
    %v726 = vunpack.c.l.b16 %v687
    %v727 = vunpack.c.l.b16 %v688
    %v728 = vunpack.c.l.b16 %v689
    %v729 = vunpack.c.l.b16 %v690
    %v730 = vunpack.c.l.b16 %v691
    %v731 = vunpack.c.l.b16 %v692
    %v732 = vunpack.c.l.b16 %v693
    %v733 = vunpack.c.l.b16 %v694
    %v734 = vunpack.c.l.b16 %v695
    %v735 = vunpack.c.l.b16 %v696
    %v736 = vunpack.c.l.b16 %v697
    %v737 = vunpack.c.l.b16 %v698
    %v738 = vunpack.c.l.b16 %v699
    %v739 = vunpack.c.l.b16 %v700
    %v740 = vpack.c.b16 %v725, %v724
    %v741 = vpack.c.b16 %v727, %v726
    %v742 = vpack.c.b16 %v729, %v728
    %v743 = vpack.c.b16 %v731, %v730
    %v744 = vpack.c.b16 %v733, %v732
    %v745 = vpack.c.b16 %v735, %v734
    %v746 = vpack.c.b16 %v737, %v736
    %v747 = vpack.c.b16 %v739, %v738
    %756 = vmatprep.subr.bf16.mxu0 0
    %757 = vmatpush1.bf16.msra.mxu0 %v740
    %758 = vmatprep.subr.bf16.mxu0 0
    %759 = vmatpush1.bf16.msra.mxu0 %v741
    %760 = vmatprep.subr.bf16.mxu0 0
    %761 = vmatpush1.bf16.msra.mxu0 %v742
    %762 = vmatprep.subr.bf16.mxu0 0
    %763 = vmatpush1.bf16.msra.mxu0 %v743
    %764 = vmatprep.subr.bf16.mxu0 0
    %765 = vmatpush1.bf16.msra.mxu0 %v744
    %766 = vmatprep.subr.bf16.mxu0 0
    %767 = vmatpush1.bf16.msra.mxu0 %v745
    %768 = vmatprep.subr.bf16.mxu0 0
    %769 = vmatpush1.bf16.msra.mxu0 %v746
    %770 = vmatprep.subr.bf16.mxu0 0
    %771 = vmatpush1.bf16.msra.mxu0 %v747
    %772 = vmatprep.subr.bf16.mxu0 0
    %773 = vmatpush1.bf16.msra.mxu0 0
    %774 = vmatprep.subr.bf16.mxu0 0
    %775 = vmatpush1.bf16.msra.mxu0 0
    %776 = vmatprep.subr.bf16.mxu0 0
    %777 = vmatpush1.bf16.msra.mxu0 0
    %778 = vmatprep.subr.bf16.mxu0 0
    %779 = vmatpush1.bf16.msra.mxu0 0
    %780 = vmatprep.subr.bf16.mxu0 0
    %781 = vmatpush1.bf16.msra.mxu0 0
    %782 = vmatprep.subr.bf16.mxu0 0
    %783 = vmatpush1.bf16.msra.mxu0 0
    %784 = vmatprep.subr.bf16.mxu0 0
    %785 = vmatpush1.bf16.msra.mxu0 0
    %786 = vmatprep.subr.bf16.mxu0 0
    %787 = vmatpush1.bf16.msra.mxu0 0
    %788 = vmatprep.mubr.bf16.mxu0 0
    %789 = vmatmul.mubr.bf16.gmra.mrb[0].mxu0 %v684
    %v790 = vpop.f32.mrb[0].mxu0
    %v791 = vadd.f32 %v706, %v790
    %v792 = vpop.f32.mrb[0].mxu0
    %v793 = vpop.f32.mrb[0].mxu0
    %v794 = vadd.f32 %v706, %v793
    %v795 = vpop.f32.mrb[0].mxu0
    %796 = vdwg.mxu0
    %797 = vst [vmem:[#allocation10] sm:$0xff] %v791
    %798 = vst [vmem:[#allocation10 + $0x8] sm:$0xff] %v794
    // Predicated region
    $region42: #{tpu_custom_call.1} parent=1 // pred_check
      _
    $region43: #{tpu_custom_call.1} parent=1 // pred_check_branch
      %800 = sbr.rel (0) target = $region45
    $region44: #{tpu_custom_call.1} parent=1 // pred_region
      %s802 = ssub.s32 256, 256
      %803 = vsyncadd [#allocation4], %s802
      %s804 = sshll.u32 [#allocation10], 4
      %s805 = int_to_ptr.vmem [resolvable:$true] %s804
      %810 = dma.vmem_to_hbm [thread:$0]  %s805, 256, %s6, [#allocation4], 128, 128, 8
    $region45: #{tpu_custom_call.1} parent=1 // pred_fallthru
      _
    // Predicated region
    $region46: #{tpu_custom_call.1} parent=1 // pred_check
      _
    $region47: #{tpu_custom_call.1} parent=1 // pred_check_branch
      %812 = sbr.rel (0) target = $region49
    $region48: #{tpu_custom_call.1} parent=1 // pred_region
      %813 = dma.done [#allocation4], 256
    $region49: #{tpu_custom_call.1} parent=1 // pred_fallthru
      _
    %814 = vsyncpa [#allocation3], 1
    %815 = vsyncpa [#allocation6], 1
    %816 = vsyncpa [#allocation9], 1
    %817 = vsyncpa [#allocation4], 1

</llo_original>
